<compile_context>
chip_gen: v5e
topology: v5e:2x2
jax: 0.10.0
libtpu: 0.0.40
codegen_flags: <defaults>
</compile_context>

<pallas_src>
import jax
import jax.numpy as jnp
from jax import lax
from jax.experimental import pallas as pl
from jax.experimental.pallas import tpu as pltpu


# ------------------------------ fused kernel ------------------------------- #

def jknet_fused_kernel(a_ref, x_ref, wg_ref, bg_ref, w1_ref, b1_ref,
                       w2_ref, b2_ref, alpha_ref, o_ref):
    """Whole JKNet forward in one kernel invocation (everything VMEM-resident).

    The GCN aggregation is algebraically identical to
        S @ (X W)  with  S = (dinv[:,None] * Ahat * dinv[None,:]).T,  Ahat = A + I
    but never builds Ahat or the scaled N x N matrix: A is consumed untransposed by
    a dot_general contracting dim 0 of both operands, and the self-loop term is the
    free VPU add `+ msg` on the [N, F] tile.
    """
    n = a_ref.shape[0]
    f = x_ref.shape[1]
    n_layers = wg_ref.shape[0]

    a = a_ref[...]

    # Degree directly in [N, 1] layout via an MXU ones-contraction (exact column
    # sums, correct for directed A); +1.0 accounts for the added self-loops.
    # Avoids the [1, N] -> [N, 1] lane->sublane relayout through the XLU.
    ones_col = jnp.ones((n, 1), dtype=a.dtype)
    deg = lax.dot_general(a, ones_col, (((0,), (0,)), ((), ())),
                          preferred_element_type=jnp.float32) + 1.0
    dinv = lax.rsqrt(deg)                            # [N, 1]; deg >= 1

    x = x_ref[...]
    w1 = w1_ref[...]

    # JumpingKnowledge('cat') fused with the first classifier matmul:
    #   z = H @ W1 = sum_l emb_l @ W1[l*F:(l+1)*F, :]
    # Slab 0 is the raw input features.
    z = jnp.dot(x, w1[0:f, :], preferred_element_type=jnp.float32)

    feat = x
    for l in range(n_layers):                        # static unroll (n_layers small)
        xw = jnp.dot(feat, wg_ref[l], preferred_element_type=jnp.float32)
        msg = dinv * xw                              # scale messages by deg^-1/2
        # agg[i, :] = sum_j Ahat[j, i] * msg[j, :]   with Ahat = A + I:
        #   A^T contraction on the MXU (contract dim 0 of both) + self-loop add.
        agg = lax.dot_general(a, msg, (((0,), (0,)), ((), ())),
                              preferred_element_type=jnp.float32) + msg
        feat = dinv * agg + bg_ref[l]
        # Accumulate this layer's JK slab directly into the classifier pre-activation.
        z = z + jnp.dot(feat, w1[(l + 1) * f:(l + 2) * f, :],
                        preferred_element_type=jnp.float32)

    # --- FeedForwardNet(n_layers=2) classifier ------------------------------ #
    z = z + b1_ref[...]
    alpha = alpha_ref[0, 0]                          # PReLU slope, SMEM scalar
    z = jnp.where(z > 0, z, alpha * z)               # PReLU; dropout == identity (eval)
    # TODO(synk): dropout layers are treated as identity (eval-mode semantics).
    # W2/b2 are zero-padded to a lane-dense output width -> unmasked full store.
    o_ref[...] = (jnp.dot(z, w2_ref[...], preferred_element_type=jnp.float32)
                  + b2_ref[...])


# ------------------------------ JKNet forward ------------------------------ #

def jknet_forward(A, X, params):
    N, F = X.shape
    L = len(params["gcn"])
    Wg = jnp.stack([w for (w, _) in params["gcn"]])          # [L, F, F]
    bg = jnp.stack([b for (_, b) in params["gcn"]])          # [L, 1, F]
    W1, b1, W2, b2, alpha = params["mlp"]
    C = W2.shape[1]

    # Lane-dense output: pad classifier width to a multiple of 128, slice after.
    CP = ((C + 127) // 128) * 128
    W2p = jnp.zeros((W2.shape[0], CP), W2.dtype).at[:, :C].set(W2)
    b2p = jnp.zeros((1, CP), b2.dtype).at[:, :C].set(b2)

    vmem = pl.BlockSpec(memory_space=pltpu.MemorySpace.VMEM)  # whole array in VMEM
    smem = pl.BlockSpec(memory_space=pltpu.MemorySpace.SMEM)  # scalar in SMEM

    out = pl.pallas_call(
        jknet_fused_kernel,
        out_shape=jax.ShapeDtypeStruct((N, CP), jnp.float32),
        in_specs=[vmem, vmem, vmem, vmem, vmem, vmem, vmem, vmem, smem],
        out_specs=vmem,
    )(A, X, Wg, bg, W1, b1, W2p, b2p, alpha)
    return out[:, :C]


# --------------------------- parameter construction ------------------------ #

def xavier_uniform(key, fan_in, fan_out, gain):
    limit = gain * jnp.sqrt(6.0 / (fan_in + fan_out))
    return jax.random.uniform(key, (fan_in, fan_out), jnp.float32, -limit, limit)


def make_params(key, num_feat, n_layers, num_classes):
    keys = jax.random.split(key, n_layers + 2)
    gcn = []
    for l in range(n_layers):
        # GCNConv weight (glorot, gain=1), bias zeros; stored [in, out]
        Wg = xavier_uniform(keys[l], num_feat, num_feat, gain=1.0)
        bg = jnp.zeros((1, num_feat), jnp.float32)
        gcn.append((Wg, bg))

    in_size = num_feat * (n_layers + 1)
    hidden = in_size * 2
    relu_gain = jnp.sqrt(2.0)
    W1 = xavier_uniform(keys[n_layers], in_size, hidden, gain=relu_gain)
    b1 = jnp.zeros((1, hidden), jnp.float32)
    W2 = xavier_uniform(keys[n_layers + 1], hidden, num_classes, gain=relu_gain)
    b2 = jnp.zeros((1, num_classes), jnp.float32)
    alpha = jnp.full((1, 1), 0.25, jnp.float32)      # PReLU default init
    return {"gcn": gcn, "mlp": (W1, b1, W2, b2, alpha)}


# --------------------------- pure-JAX reference ----------------------------- #

def jknet_reference(A, X, params):
    """Reference JKNet forward.

    Uses the factored gcn_norm aggregation
        out[i] = dinv[i] * sum_j Ahat[j,i] * dinv[j] * (X W)[j]
    which is algebraically identical to S @ (X W) with
        S = (dinv[:,None] * Ahat * dinv[None,:]).T   (PyG gcn_norm).
    """
    N = A.shape[0]
    ahat = A + jnp.eye(N, dtype=A.dtype)
    deg = ahat.sum(axis=0, keepdims=True)            # [1, N] column sums
    dinv = lax.rsqrt(deg).T                          # [N, 1]
    emb = [X]
    feat = X
    for (Wg, bgl) in params["gcn"]:
        msg = dinv * (feat @ Wg)
        agg = lax.dot_general(ahat, msg, (((0,), (0,)), ((), ())))
        feat = dinv * agg + bgl
        emb.append(feat)
    H = jnp.concatenate(emb, axis=-1)
    W1, b1, W2, b2, alpha = params["mlp"]
    z = H @ W1 + b1
    z = jnp.where(z > 0, z, alpha[0, 0] * z)
    return z @ W2 + b2


# ----------------------------------- main ----------------------------------- #

if __name__ == "__main__":
    N = 64            # number of graph nodes
    num_feat = 16     # feature dim
    n_layers = 2      # GCN layers
    num_classes = 4   # len(np.unique(Ys))

    key = jax.random.PRNGKey(0)
    k_a, k_x, k_p = jax.random.split(key, 3)

    # Deterministic symmetric 0/1 adjacency with empty diagonal.
    raw = jax.random.uniform(k_a, (N, N)) < 0.15
    A = jnp.logical_or(raw, raw.T)
    A = A.at[jnp.arange(N), jnp.arange(N)].set(False).astype(jnp.float32)

    X = jax.random.normal(k_x, (N, num_feat), jnp.float32)
    params = make_params(k_p, num_feat, n_layers, num_classes)

    fwd = jax.jit(jknet_forward)
    out = jax.block_until_ready(fwd(A, X, params))

    ref = jknet_reference(A, X, params)
    assert out.shape == (N, num_classes)
    # 1e-3 leaves headroom for MXU default-precision rounding differences between
    # the Mosaic kernel and the XLA reference; real bugs show up at O(0.1-1).
    assert jnp.allclose(out, ref, atol=1e-3, rtol=1e-3), "mismatch vs reference"

    print("KERNEL_OK")
</pallas_src>

<mosaic_0001>
module attributes {stable_mosaic.version = 11 : i64} {
  func.func @jknet_fused_kernel(%arg0: memref<64x64xf32, #tpu.memory_space<vmem>>, %arg1: memref<64x16xf32, #tpu.memory_space<vmem>>, %arg2: memref<2x16x16xf32, #tpu.memory_space<vmem>>, %arg3: memref<2x1x16xf32, #tpu.memory_space<vmem>>, %arg4: memref<48x96xf32, #tpu.memory_space<vmem>>, %arg5: memref<1x96xf32, #tpu.memory_space<vmem>>, %arg6: memref<96x128xf32, #tpu.memory_space<vmem>>, %arg7: memref<1x128xf32, #tpu.memory_space<vmem>>, %arg8: memref<1x1xf32, #tpu.memory_space<smem>>, %arg9: memref<64x128xf32, #tpu.memory_space<vmem>>) attributes {dimension_semantics = [], scalar_prefetch = 0 : i64, scratch_operands = 0 : i64, tpu.core_type = #tpu.core_type<tc>} {
    %c0 = arith.constant 0 : index
    %c0_0 = arith.constant 0 : index
    %0 = vector.load %arg0[%c0, %c0_0] : memref<64x64xf32, #tpu.memory_space<vmem>>, vector<64x64xf32>
    %cst = arith.constant 1.000000e+00 : f32
    %1 = vector.broadcast %cst : f32 to vector<64x1xf32>
    %cst_1 = arith.constant dense<0.000000e+00> : vector<64x1xf32>
    %2 = tpu.matmul %0, %1, %cst_1 {dimension_numbers = #tpu.dot_dimension_numbers<[0], [0], [1], [1], [0, 1, 1, 1], [], []>} : vector<64x64xf32>, vector<64x1xf32>, vector<64x1xf32> -> vector<64x1xf32>
    %cst_2 = arith.constant 1.000000e+00 : f32
    %3 = vector.broadcast %cst_2 : f32 to vector<64x1xf32>
    %4 = arith.addf %2, %3 : vector<64x1xf32>
    %5 = math.rsqrt %4 : vector<64x1xf32>
    %c0_3 = arith.constant 0 : index
    %c0_4 = arith.constant 0 : index
    %6 = vector.load %arg1[%c0_3, %c0_4] : memref<64x16xf32, #tpu.memory_space<vmem>>, vector<64x16xf32>
    %c0_5 = arith.constant 0 : index
    %c0_6 = arith.constant 0 : index
    %7 = vector.load %arg4[%c0_5, %c0_6] : memref<48x96xf32, #tpu.memory_space<vmem>>, vector<48x96xf32>
    %8 = vector.extract_strided_slice %7 {offsets = [0, 0], sizes = [16, 96], strides = [1, 1]} : vector<48x96xf32> to vector<16x96xf32>
    %cst_7 = arith.constant dense<0.000000e+00> : vector<64x96xf32>
    %9 = tpu.matmul %6, %8, %cst_7 {dimension_numbers = #tpu.dot_dimension_numbers<[1], [0], [0], [1], [0, 0, 1, 1], [], []>} : vector<64x16xf32>, vector<16x96xf32>, vector<64x96xf32> -> vector<64x96xf32>
    %c0_8 = arith.constant 0 : index
    %c0_9 = arith.constant 0 : index
    %c0_10 = arith.constant 0 : index
    %10 = vector.load %arg2[%c0_8, %c0_9, %c0_10] : memref<2x16x16xf32, #tpu.memory_space<vmem>>, vector<1x16x16xf32>
    %11 = vector.shape_cast %10 : vector<1x16x16xf32> to vector<16x16xf32>
    %cst_11 = arith.constant dense<0.000000e+00> : vector<64x16xf32>
    %12 = tpu.matmul %6, %11, %cst_11 {dimension_numbers = #tpu.dot_dimension_numbers<[1], [0], [0], [1], [0, 0, 1, 1], [], []>} : vector<64x16xf32>, vector<16x16xf32>, vector<64x16xf32> -> vector<64x16xf32>
    %13 = vector.broadcast %5 : vector<64x1xf32> to vector<64x16xf32>
    %14 = arith.mulf %13, %12 : vector<64x16xf32>
    %cst_12 = arith.constant dense<0.000000e+00> : vector<64x16xf32>
    %15 = tpu.matmul %0, %14, %cst_12 {dimension_numbers = #tpu.dot_dimension_numbers<[0], [0], [1], [1], [0, 1, 1, 1], [], []>} : vector<64x64xf32>, vector<64x16xf32>, vector<64x16xf32> -> vector<64x16xf32>
    %16 = arith.addf %15, %14 : vector<64x16xf32>
    %17 = vector.broadcast %5 : vector<64x1xf32> to vector<64x16xf32>
    %18 = arith.mulf %17, %16 : vector<64x16xf32>
    %c0_13 = arith.constant 0 : index
    %c0_14 = arith.constant 0 : index
    %c0_15 = arith.constant 0 : index
    %19 = vector.load %arg3[%c0_13, %c0_14, %c0_15] : memref<2x1x16xf32, #tpu.memory_space<vmem>>, vector<1x1x16xf32>
    %20 = vector.shape_cast %19 : vector<1x1x16xf32> to vector<1x16xf32>
    %21 = vector.broadcast %20 : vector<1x16xf32> to vector<64x16xf32>
    %22 = arith.addf %18, %21 : vector<64x16xf32>
    %23 = vector.extract_strided_slice %7 {offsets = [16, 0], sizes = [16, 96], strides = [1, 1]} : vector<48x96xf32> to vector<16x96xf32>
    %cst_16 = arith.constant dense<0.000000e+00> : vector<64x96xf32>
    %24 = tpu.matmul %22, %23, %cst_16 {dimension_numbers = #tpu.dot_dimension_numbers<[1], [0], [0], [1], [0, 0, 1, 1], [], []>} : vector<64x16xf32>, vector<16x96xf32>, vector<64x96xf32> -> vector<64x96xf32>
    %25 = arith.addf %9, %24 : vector<64x96xf32>
    %c1 = arith.constant 1 : index
    %c0_17 = arith.constant 0 : index
    %c0_18 = arith.constant 0 : index
    %26 = vector.load %arg2[%c1, %c0_17, %c0_18] : memref<2x16x16xf32, #tpu.memory_space<vmem>>, vector<1x16x16xf32>
    %27 = vector.shape_cast %26 : vector<1x16x16xf32> to vector<16x16xf32>
    %cst_19 = arith.constant dense<0.000000e+00> : vector<64x16xf32>
    %28 = tpu.matmul %22, %27, %cst_19 {dimension_numbers = #tpu.dot_dimension_numbers<[1], [0], [0], [1], [0, 0, 1, 1], [], []>} : vector<64x16xf32>, vector<16x16xf32>, vector<64x16xf32> -> vector<64x16xf32>
    %29 = vector.broadcast %5 : vector<64x1xf32> to vector<64x16xf32>
    %30 = arith.mulf %29, %28 : vector<64x16xf32>
    %cst_20 = arith.constant dense<0.000000e+00> : vector<64x16xf32>
    %31 = tpu.matmul %0, %30, %cst_20 {dimension_numbers = #tpu.dot_dimension_numbers<[0], [0], [1], [1], [0, 1, 1, 1], [], []>} : vector<64x64xf32>, vector<64x16xf32>, vector<64x16xf32> -> vector<64x16xf32>
    %32 = arith.addf %31, %30 : vector<64x16xf32>
    %33 = vector.broadcast %5 : vector<64x1xf32> to vector<64x16xf32>
    %34 = arith.mulf %33, %32 : vector<64x16xf32>
    %c1_21 = arith.constant 1 : index
    %c0_22 = arith.constant 0 : index
    %c0_23 = arith.constant 0 : index
    %35 = vector.load %arg3[%c1_21, %c0_22, %c0_23] : memref<2x1x16xf32, #tpu.memory_space<vmem>>, vector<1x1x16xf32>
    %36 = vector.shape_cast %35 : vector<1x1x16xf32> to vector<1x16xf32>
    %37 = vector.broadcast %36 : vector<1x16xf32> to vector<64x16xf32>
    %38 = arith.addf %34, %37 : vector<64x16xf32>
    %39 = vector.extract_strided_slice %7 {offsets = [32, 0], sizes = [16, 96], strides = [1, 1]} : vector<48x96xf32> to vector<16x96xf32>
    %cst_24 = arith.constant dense<0.000000e+00> : vector<64x96xf32>
    %40 = tpu.matmul %38, %39, %cst_24 {dimension_numbers = #tpu.dot_dimension_numbers<[1], [0], [0], [1], [0, 0, 1, 1], [], []>} : vector<64x16xf32>, vector<16x96xf32>, vector<64x96xf32> -> vector<64x96xf32>
    %41 = arith.addf %25, %40 : vector<64x96xf32>
    %c0_25 = arith.constant 0 : index
    %c0_26 = arith.constant 0 : index
    %42 = vector.load %arg5[%c0_25, %c0_26] : memref<1x96xf32, #tpu.memory_space<vmem>>, vector<1x96xf32>
    %43 = vector.broadcast %42 : vector<1x96xf32> to vector<64x96xf32>
    %44 = arith.addf %41, %43 : vector<64x96xf32>
    %c0_27 = arith.constant 0 : index
    %c0_28 = arith.constant 0 : index
    %45 = memref.load %arg8[%c0_27, %c0_28] : memref<1x1xf32, #tpu.memory_space<smem>>
    %cst_29 = arith.constant 0.000000e+00 : f32
    %46 = vector.broadcast %cst_29 : f32 to vector<64x96xf32>
    %47 = arith.cmpf ogt, %44, %46 : vector<64x96xf32>
    %48 = vector.broadcast %45 : f32 to vector<64x96xf32>
    %49 = arith.mulf %48, %44 : vector<64x96xf32>
    %50 = arith.select %47, %44, %49 : vector<64x96xi1>, vector<64x96xf32>
    %c0_30 = arith.constant 0 : index
    %c0_31 = arith.constant 0 : index
    %51 = vector.load %arg6[%c0_30, %c0_31] : memref<96x128xf32, #tpu.memory_space<vmem>>, vector<96x128xf32>
    %cst_32 = arith.constant dense<0.000000e+00> : vector<64x128xf32>
    %52 = tpu.matmul %50, %51, %cst_32 {dimension_numbers = #tpu.dot_dimension_numbers<[1], [0], [0], [1], [0, 0, 1, 1], [], []>} : vector<64x96xf32>, vector<96x128xf32>, vector<64x128xf32> -> vector<64x128xf32>
    %c0_33 = arith.constant 0 : index
    %c0_34 = arith.constant 0 : index
    %53 = vector.load %arg7[%c0_33, %c0_34] : memref<1x128xf32, #tpu.memory_space<vmem>>, vector<1x128xf32>
    %54 = vector.broadcast %53 : vector<1x128xf32> to vector<64x128xf32>
    %55 = arith.addf %52, %54 : vector<64x128xf32>
    %c0_35 = arith.constant 0 : index
    %c0_36 = arith.constant 0 : index
    %56 = vector.load %arg9[%c0_35, %c0_36] : memref<64x128xf32, #tpu.memory_space<vmem>>, vector<64x128xf32>
    tpu.vector_store %arg9[%c0_35, %c0_36], %55 {strides = array<i32>} : memref<64x128xf32, #tpu.memory_space<vmem>>, vector<64x128xf32>,
    return
  }
}

</mosaic_0001>

<llo_original>
// kernel: jknet_forward.1
$region0: #{jknet_forward.1}
  #allocation0 [shape = 'u32[]', space=smem, size = 0x4, offset = 0x4, fixed_abs, tag = 'smem constant byte address 0x4 - core index']
  #allocation1 [shape = 'u32[72,128]{1,0:T(1,128)}', space=vmem, size = 0x9000, scoped, tag = 'internal scratch']
  #allocation2 [shape = 'f32[1,1]{1,0:T(1,128)S(6)}', space=smem, size = 0x200, scoped, tag = 'scoped memory for jknet_forward.1']
  %s0 = inlined_call_operand.vmem [shape: f32[64,64], index: 0, kind: input, shape index: {}]
  %s1 = inlined_call_operand.vmem [shape: f32[64,16], index: 1, kind: input, shape index: {}]
  %s2 = inlined_call_operand.vmem [shape: f32[2,16,16], index: 2, kind: input, shape index: {}]
  %s3 = inlined_call_operand.vmem [shape: f32[2,1,16], index: 3, kind: input, shape index: {}]
  %s4 = inlined_call_operand.vmem [shape: f32[48,96], index: 4, kind: input, shape index: {}]
  %s5 = inlined_call_operand.vmem [shape: f32[1,96], index: 5, kind: input, shape index: {}]
  %s6 = inlined_call_operand.vmem [shape: f32[96,128], index: 6, kind: input, shape index: {}]
  %s7 = inlined_call_operand.vmem [shape: f32[1,128], index: 7, kind: input, shape index: {}]
  %s8 = inlined_call_operand.<no memory space> [shape: f32[1,1], index: 8, kind: input, shape index: {}]
  %s9 = inlined_call_operand.vmem [shape: f32[64,128], index: 9, kind: output, shape index: {}]
  %s10 = sld [smem:[#allocation0]]
  $region46: #{jknet_forward.1} parent=0
    _
  %s12 = ssub.s32 1, %s10
  %s13 = scalar_select 0, %s12, %s10
  %14 = sst [smem:[#allocation2]] %s8
  // Predicated region
  $region2: #{jknet_forward.1} parent=0 // pred_check
    _
  $region3: #{jknet_forward.1} parent=0 // pred_check_branch
    %16 = sbr.rel (0) target = $region5
  $region4: #{jknet_forward.1} parent=0 // pred_region
    _
  $region5: #{jknet_forward.1} parent=0 // pred_fallthru
    _
  // Predicated region
  $region6: #{jknet_forward.1} parent=0 // pred_check
    _
  $region7: #{jknet_forward.1} parent=0 // pred_check_branch
    %18 = sbr.rel (0) target = $region9
  $region8: #{jknet_forward.1} parent=0 // pred_region
    _
  $region9: #{jknet_forward.1} parent=0 // pred_fallthru
    _
  // Predicated region
  $region10: #{jknet_forward.1} parent=0 // pred_check
    _
  $region11: #{jknet_forward.1} parent=0 // pred_check_branch
    %20 = sbr.rel (0) target = $region13
  $region12: #{jknet_forward.1} parent=0 // pred_region
    _
  $region13: #{jknet_forward.1} parent=0 // pred_fallthru
    _
  // Predicated region
  $region14: #{jknet_forward.1} parent=0 // pred_check
    _
  $region15: #{jknet_forward.1} parent=0 // pred_check_branch
    %22 = sbr.rel (0) target = $region17
  $region16: #{jknet_forward.1} parent=0 // pred_region
    _
  $region17: #{jknet_forward.1} parent=0 // pred_fallthru
    _
  // Predicated region
  $region18: #{jknet_forward.1} parent=0 // pred_check
    _
  $region19: #{jknet_forward.1} parent=0 // pred_check_branch
    %24 = sbr.rel (0) target = $region21
  $region20: #{jknet_forward.1} parent=0 // pred_region
    _
  $region21: #{jknet_forward.1} parent=0 // pred_fallthru
    _
  // Predicated region
  $region22: #{jknet_forward.1} parent=0 // pred_check
    _
  $region23: #{jknet_forward.1} parent=0 // pred_check_branch
    %26 = sbr.rel (0) target = $region25
  $region24: #{jknet_forward.1} parent=0 // pred_region
    _
  $region25: #{jknet_forward.1} parent=0 // pred_fallthru
    _
  // Predicated region
  $region26: #{jknet_forward.1} parent=0 // pred_check
    _
  $region27: #{jknet_forward.1} parent=0 // pred_check_branch
    %28 = sbr.rel (0) target = $region29
  $region28: #{jknet_forward.1} parent=0 // pred_region
    _
  $region29: #{jknet_forward.1} parent=0 // pred_fallthru
    _
  // Predicated region
  $region30: #{jknet_forward.1} parent=0 // pred_check
    _
  $region31: #{jknet_forward.1} parent=0 // pred_check_branch
    %30 = sbr.rel (0) target = $region33
  $region32: #{jknet_forward.1} parent=0 // pred_region
    _
  $region33: #{jknet_forward.1} parent=0 // pred_fallthru
    _
  // Predicated region
  $region34: #{jknet_forward.1} parent=0 // pred_check
    _
  $region35: #{jknet_forward.1} parent=0 // pred_check_branch
    %32 = sbr.rel (0) target = $region37
  $region36: #{jknet_forward.1} parent=0 // pred_region
    _
  $region37: #{jknet_forward.1} parent=0 // pred_fallthru
    _
  %v33 = vld [vmem:[%s0] sm:$0xff]
  %v34 = vld [vmem:[%s0 + $0x8] sm:$0xff]
  %v35 = vld [vmem:[%s0 + $0x10] sm:$0xff]
  %v36 = vld [vmem:[%s0 + $0x18] sm:$0xff]
  %v37 = vld [vmem:[%s0 + $0x20] sm:$0xff]
  %v38 = vld [vmem:[%s0 + $0x28] sm:$0xff]
  %v39 = vld [vmem:[%s0 + $0x30] sm:$0xff]
  %v40 = vld [vmem:[%s0 + $0x38] sm:$0xff]
  %41 = vxpose.xlu0.b32.start [1/16] %v33, 128
  %42 = vxpose.xlu0.b32.cont [2/16] %v34, 128
  %43 = vxpose.xlu0.b32.cont [3/16] %v35, 128
  %44 = vxpose.xlu0.b32.cont [4/16] %v36, 128
  %45 = vxpose.xlu0.b32.cont [5/16] %v37, 128
  %46 = vxpose.xlu0.b32.cont [6/16] %v38, 128
  %47 = vxpose.xlu0.b32.cont [7/16] %v39, 128
  %48 = vxpose.xlu0.b32.cont [8/16] %v40, 128
  %49 = vxpose.xlu0.b32.cont [9/16] 0.0, 128
  %50 = vxpose.xlu0.b32.cont [10/16] 0.0, 128
  %51 = vxpose.xlu0.b32.cont [11/16] 0.0, 128
  %52 = vxpose.xlu0.b32.cont [12/16] 0.0, 128
  %53 = vxpose.xlu0.b32.cont [13/16] 0.0, 128
  %54 = vxpose.xlu0.b32.cont [14/16] 0.0, 128
  %55 = vxpose.xlu0.b32.cont [15/16] 0.0, 128
  %56 = vxpose.xlu0.b32.end [16/16] 0.0, 128
  %v57 = vpop.trf.xlu0
  %v58 = vpop.trf.xlu0
  %v59 = vpop.trf.xlu0
  %v60 = vpop.trf.xlu0
  %v61 = vpop.trf.xlu0
  %v62 = vpop.trf.xlu0
  %v63 = vpop.trf.xlu0
  %v64 = vpop.trf.xlu0
  %v65 = vpop.trf.xlu0
  %v66 = vpop.trf.xlu0
  %v67 = vpop.trf.xlu0
  %v68 = vpop.trf.xlu0
  %v69 = vpop.trf.xlu0
  %v70 = vpop.trf.xlu0
  %v71 = vpop.trf.xlu0
  %v72 = vpop.trf.xlu0
  %vm73 = vcmask 523264
  %v75 = vsel %vm73, %v57, 0
  %v78 = vsel %vm73, %v58, 0
  %v81 = vsel %vm73, %v59, 0
  %v84 = vsel %vm73, %v60, 0
  %v87 = vsel %vm73, %v61, 0
  %v90 = vsel %vm73, %v62, 0
  %v93 = vsel %vm73, %v63, 0
  %v96 = vsel %vm73, %v64, 0
  %98 = vmatpush.msra.mxu0 0.0
  %99 = vmatpush.msra.mxu0 0.0
  %100 = vmatpush.msra.mxu0 0.0
  %101 = vmatpush.msra.mxu0 0.0
  %102 = vmatpush.msra.mxu0 0.0
  %103 = vmatpush.msra.mxu0 0.0
  %104 = vmatpush.msra.mxu0 0.0
  %105 = vmatpush.msra.mxu0 0.0
  %106 = vmatpush.msra.mxu0 1.0
  %107 = vmatpush.msra.mxu0 1.0
  %108 = vmatpush.msra.mxu0 1.0
  %109 = vmatpush.msra.mxu0 1.0
  %110 = vmatpush.msra.mxu0 1.0
  %111 = vmatpush.msra.mxu0 1.0
  %112 = vmatpush.msra.mxu0 1.0
  %113 = vmatpush.msra.mxu0 1.0
  %114 = vmatmul.f32.gmra.mxu0 %v75
  %v115 = vpop.f32.mrf.mxu0
  %v116 = vadd.f32 1.0, %v115
  %117 = vmatmul.f32.gmra.mxu0 %v78
  %v118 = vpop.f32.mrf.mxu0
  %v119 = vadd.f32 1.0, %v118
  %120 = vmatmul.f32.gmra.mxu0 %v81
  %v121 = vpop.f32.mrf.mxu0
  %v122 = vadd.f32 1.0, %v121
  %123 = vmatmul.f32.gmra.mxu0 %v84
  %v124 = vpop.f32.mrf.mxu0
  %v125 = vadd.f32 1.0, %v124
  %126 = vmatmul.f32.gmra.mxu0 %v87
  %v127 = vpop.f32.mrf.mxu0
  %v128 = vadd.f32 1.0, %v127
  %129 = vmatmul.f32.gmra.mxu0 %v90
  %v130 = vpop.f32.mrf.mxu0
  %v131 = vadd.f32 1.0, %v130
  %132 = vmatmul.f32.gmra.mxu0 %v93
  %v133 = vpop.f32.mrf.mxu0
  %v134 = vadd.f32 1.0, %v133
  %135 = vmatmul.f32.gmra.mxu0 %v96
  %v136 = vpop.f32.mrf.mxu0
  %v137 = vadd.f32 1.0, %v136
  %138 = vdwg.mxu0
  %v139 = vrsqrt.pop %v116
  %v140 = vmul.f32 %v139, %v116
  %v141 = vmul.f32 %v140, %v139
  %v142 = vmul.f32 0.5, %v141
  %v143 = vsub.f32 1.5, %v142
  %v144 = vmul.f32 %v139, %v143
  %vm145 = vweird.f32 %v116
  %vm146 = vweird.f32 %v139
  %vm147 = vmor %vm145, %vm146
  %v148 = vsel %vm147, %v139, %v144
  %v149 = vrsqrt.pop %v119
  %v150 = vmul.f32 %v149, %v119
  %v151 = vmul.f32 %v150, %v149
  %v152 = vmul.f32 0.5, %v151
  %v153 = vsub.f32 1.5, %v152
  %v154 = vmul.f32 %v149, %v153
  %vm155 = vweird.f32 %v119
  %vm156 = vweird.f32 %v149
  %vm157 = vmor %vm155, %vm156
  %v158 = vsel %vm157, %v149, %v154
  %v159 = vrsqrt.pop %v122
  %v160 = vmul.f32 %v159, %v122
  %v161 = vmul.f32 %v160, %v159
  %v162 = vmul.f32 0.5, %v161
  %v163 = vsub.f32 1.5, %v162
  %v164 = vmul.f32 %v159, %v163
  %vm165 = vweird.f32 %v122
  %vm166 = vweird.f32 %v159
  %vm167 = vmor %vm165, %vm166
  %v168 = vsel %vm167, %v159, %v164
  %v169 = vrsqrt.pop %v125
  %v170 = vmul.f32 %v169, %v125
  %v171 = vmul.f32 %v170, %v169
  %v172 = vmul.f32 0.5, %v171
  %v173 = vsub.f32 1.5, %v172
  %v174 = vmul.f32 %v169, %v173
  %vm175 = vweird.f32 %v125
  %vm176 = vweird.f32 %v169
  %vm177 = vmor %vm175, %vm176
  %v178 = vsel %vm177, %v169, %v174
  %v179 = vrsqrt.pop %v128
  %v180 = vmul.f32 %v179, %v128
  %v181 = vmul.f32 %v180, %v179
  %v182 = vmul.f32 0.5, %v181
  %v183 = vsub.f32 1.5, %v182
  %v184 = vmul.f32 %v179, %v183
  %vm185 = vweird.f32 %v128
  %vm186 = vweird.f32 %v179
  %vm187 = vmor %vm185, %vm186
  %v188 = vsel %vm187, %v179, %v184
  %v189 = vrsqrt.pop %v131
  %v190 = vmul.f32 %v189, %v131
  %v191 = vmul.f32 %v190, %v189
  %v192 = vmul.f32 0.5, %v191
  %v193 = vsub.f32 1.5, %v192
  %v194 = vmul.f32 %v189, %v193
  %vm195 = vweird.f32 %v131
  %vm196 = vweird.f32 %v189
  %vm197 = vmor %vm195, %vm196
  %v198 = vsel %vm197, %v189, %v194
  %v199 = vrsqrt.pop %v134
  %v200 = vmul.f32 %v199, %v134
  %v201 = vmul.f32 %v200, %v199
  %v202 = vmul.f32 0.5, %v201
  %v203 = vsub.f32 1.5, %v202
  %v204 = vmul.f32 %v199, %v203
  %vm205 = vweird.f32 %v134
  %vm206 = vweird.f32 %v199
  %vm207 = vmor %vm205, %vm206
  %v208 = vsel %vm207, %v199, %v204
  %v209 = vrsqrt.pop %v137
  %v210 = vmul.f32 %v209, %v137
  %v211 = vmul.f32 %v210, %v209
  %v212 = vmul.f32 0.5, %v211
  %v213 = vsub.f32 1.5, %v212
  %v214 = vmul.f32 %v209, %v213
  %vm215 = vweird.f32 %v137
  %vm216 = vweird.f32 %v209
  %vm217 = vmor %vm215, %vm216
  %v218 = vsel %vm217, %v209, %v214
  %v219 = vld [vmem:[%s1] sm:$0xff]
  %v220 = vld [vmem:[%s1 + $0x8] sm:$0xff]
  %v221 = vld [vmem:[%s1 + $0x10] sm:$0xff]
  %v222 = vld [vmem:[%s1 + $0x18] sm:$0xff]
  %v223 = vld [vmem:[%s1 + $0x20] sm:$0xff]
  %v224 = vld [vmem:[%s1 + $0x28] sm:$0xff]
  %v225 = vld [vmem:[%s1 + $0x30] sm:$0xff]
  %v226 = vld [vmem:[%s1 + $0x38] sm:$0xff]
  %v227 = vld [vmem:[%s4] sm:$0xff]
  %v228 = vld [vmem:[%s4 + $0x8] sm:$0xff]
  %v229 = vld [vmem:[%s4 + $0x10] sm:$0xff]
  %v230 = vld [vmem:[%s4 + $0x18] sm:$0xff]
  %v231 = vld [vmem:[%s4 + $0x20] sm:$0xff]
  %v232 = vld [vmem:[%s4 + $0x28] sm:$0xff]
  %v233 = vld [vmem:[%s2] sm:$0xff]
  %v234 = vld [vmem:[%s2 + $0x8] sm:$0xff]
  %vm235 = vcmask 130048
  %v237 = vsel %vm235, %v219, 0
  %v240 = vsel %vm235, %v220, 0
  %v243 = vsel %vm235, %v221, 0
  %v246 = vsel %vm235, %v222, 0
  %v249 = vsel %vm235, %v223, 0
  %v252 = vsel %vm235, %v224, 0
  %v255 = vsel %vm235, %v225, 0
  %v258 = vsel %vm235, %v226, 0
  %260 = vmatpush.msra.mxu0 0.0
  %261 = vmatpush.msra.mxu0 0.0
  %262 = vmatpush.msra.mxu0 0.0
  %263 = vmatpush.msra.mxu0 0.0
  %264 = vmatpush.msra.mxu0 0.0
  %265 = vmatpush.msra.mxu0 0.0
  %266 = vmatpush.msra.mxu0 0.0
  %267 = vmatpush.msra.mxu0 0.0
  %268 = vmatpush.msra.mxu0 0.0
  %269 = vmatpush.msra.mxu0 0.0
  %270 = vmatpush.msra.mxu0 0.0
  %271 = vmatpush.msra.mxu0 0.0
  %272 = vmatpush.msra.mxu0 0.0
  %273 = vmatpush.msra.mxu0 0.0
  %274 = vmatpush.msra.mxu0 %v234
  %275 = vmatpush.msra.mxu0 %v233
  %276 = vmatmul.f32.gmra.mxu0 %v237
  %v277 = vpop.f32.mrf.mxu0
  %v278 = vadd.f32 0.0, %v277
  %279 = vmatmul.f32.gmra.mxu0 %v240
  %v280 = vpop.f32.mrf.mxu0
  %v281 = vadd.f32 0.0, %v280
  %282 = vmatmul.f32.gmra.mxu0 %v243
  %v283 = vpop.f32.mrf.mxu0
  %v284 = vadd.f32 0.0, %v283
  %285 = vmatmul.f32.gmra.mxu0 %v246
  %v286 = vpop.f32.mrf.mxu0
  %v287 = vadd.f32 0.0, %v286
  %288 = vmatmul.f32.gmra.mxu0 %v249
  %v289 = vpop.f32.mrf.mxu0
  %v290 = vadd.f32 0.0, %v289
  %291 = vmatmul.f32.gmra.mxu0 %v252
  %v292 = vpop.f32.mrf.mxu0
  %v293 = vadd.f32 0.0, %v292
  %294 = vmatmul.f32.gmra.mxu0 %v255
  %v295 = vpop.f32.mrf.mxu0
  %v296 = vadd.f32 0.0, %v295
  %297 = vmatmul.f32.gmra.mxu0 %v258
  %v298 = vpop.f32.mrf.mxu0
  %v299 = vadd.f32 0.0, %v298
  %300 = vdwg.mxu0
  %302 = vset.pattern.permute.xlu0 0
  %303 = vperm.xlu0 %302, %v148
  %v304 = vpop.permute.xlu0 %303
  %307 = vset.pattern.permute.xlu0 0
  %308 = vperm.xlu0 %307, %v158
  %v309 = vpop.permute.xlu0 %308
  %312 = vset.pattern.permute.xlu0 0
  %313 = vperm.xlu0 %312, %v168
  %v314 = vpop.permute.xlu0 %313
  %317 = vset.pattern.permute.xlu0 0
  %318 = vperm.xlu0 %317, %v178
  %v319 = vpop.permute.xlu0 %318
  %322 = vset.pattern.permute.xlu0 0
  %323 = vperm.xlu0 %322, %v188
  %v324 = vpop.permute.xlu0 %323
  %327 = vset.pattern.permute.xlu0 0
  %328 = vperm.xlu0 %327, %v198
  %v329 = vpop.permute.xlu0 %328
  %332 = vset.pattern.permute.xlu0 0
  %333 = vperm.xlu0 %332, %v208
  %v334 = vpop.permute.xlu0 %333
  %337 = vset.pattern.permute.xlu0 0
  %338 = vperm.xlu0 %337, %v218
  %v339 = vpop.permute.xlu0 %338
  %v341 = vmul.f32 %v304, %v278
  %v342 = vmul.f32 %v309, %v281
  %v343 = vmul.f32 %v314, %v284
  %v344 = vmul.f32 %v319, %v287
  %v345 = vmul.f32 %v324, %v290
  %v346 = vmul.f32 %v329, %v293
  %v347 = vmul.f32 %v334, %v296
  %v348 = vmul.f32 %v339, %v299
  %349 = vmatpush.msra.mxu0 0.0
  %350 = vmatpush.msra.mxu0 0.0
  %351 = vmatpush.msra.mxu0 0.0
  %352 = vmatpush.msra.mxu0 0.0
  %353 = vmatpush.msra.mxu0 0.0
  %354 = vmatpush.msra.mxu0 0.0
  %355 = vmatpush.msra.mxu0 0.0
  %356 = vmatpush.msra.mxu0 0.0
  %357 = vmatpush.msra.mxu0 %v348
  %358 = vmatpush.msra.mxu0 %v347
  %359 = vmatpush.msra.mxu0 %v346
  %360 = vmatpush.msra.mxu0 %v345
  %361 = vmatpush.msra.mxu0 %v344
  %362 = vmatpush.msra.mxu0 %v343
  %363 = vmatpush.msra.mxu0 %v342
  %364 = vmatpush.msra.mxu0 %v341
  %365 = vmatmul.f32.gmra.mxu0 %v75
  %v366 = vpop.f32.mrf.mxu0
  %v367 = vadd.f32 %v341, %v366
  %368 = vmatmul.f32.gmra.mxu0 %v78
  %v369 = vpop.f32.mrf.mxu0
  %v370 = vadd.f32 %v342, %v369
  %371 = vmatmul.f32.gmra.mxu0 %v81
  %v372 = vpop.f32.mrf.mxu0
  %v373 = vadd.f32 %v343, %v372
  %374 = vmatmul.f32.gmra.mxu0 %v84
  %v375 = vpop.f32.mrf.mxu0
  %v376 = vadd.f32 %v344, %v375
  %377 = vmatmul.f32.gmra.mxu0 %v87
  %v378 = vpop.f32.mrf.mxu0
  %v379 = vadd.f32 %v345, %v378
  %380 = vmatmul.f32.gmra.mxu0 %v90
  %v381 = vpop.f32.mrf.mxu0
  %v382 = vadd.f32 %v346, %v381
  %383 = vmatmul.f32.gmra.mxu0 %v93
  %v384 = vpop.f32.mrf.mxu0
  %v385 = vadd.f32 %v347, %v384
  %386 = vmatmul.f32.gmra.mxu0 %v96
  %v387 = vpop.f32.mrf.mxu0
  %v388 = vadd.f32 %v348, %v387
  %389 = vdwg.mxu0
  %v390 = vmul.f32 %v304, %v367
  %v391 = vmul.f32 %v309, %v370
  %v392 = vmul.f32 %v314, %v373
  %v393 = vmul.f32 %v319, %v376
  %v394 = vmul.f32 %v324, %v379
  %v395 = vmul.f32 %v329, %v382
  %v396 = vmul.f32 %v334, %v385
  %v397 = vmul.f32 %v339, %v388
  %v398 = vld [vmem:[%s3] sm:$0x1]
  %v400 = vperm.slane %v398, 0
  %v402 = vadd.f32 %v390, %v400
  %v403 = vadd.f32 %v391, %v400
  %v404 = vadd.f32 %v392, %v400
  %v405 = vadd.f32 %v393, %v400
  %v406 = vadd.f32 %v394, %v400
  %v407 = vadd.f32 %v395, %v400
  %v408 = vadd.f32 %v396, %v400
  %v409 = vadd.f32 %v397, %v400
  %v411 = vsel %vm235, %v402, 0
  %v414 = vsel %vm235, %v403, 0
  %v417 = vsel %vm235, %v404, 0
  %v420 = vsel %vm235, %v405, 0
  %v423 = vsel %vm235, %v406, 0
  %v426 = vsel %vm235, %v407, 0
  %v429 = vsel %vm235, %v408, 0
  %v432 = vsel %vm235, %v409, 0
  %434 = vmatpush.msra.mxu0 0.0
  %435 = vmatpush.msra.mxu0 0.0
  %436 = vmatpush.msra.mxu0 0.0
  %437 = vmatpush.msra.mxu0 0.0
  %438 = vmatpush.msra.mxu0 0.0
  %439 = vmatpush.msra.mxu0 0.0
  %440 = vmatpush.msra.mxu0 0.0
  %441 = vmatpush.msra.mxu0 0.0
  %442 = vmatpush.msra.mxu0 0.0
  %443 = vmatpush.msra.mxu0 0.0
  %444 = vmatpush.msra.mxu0 0.0
  %445 = vmatpush.msra.mxu0 0.0
  %446 = vmatpush.msra.mxu0 0.0
  %447 = vmatpush.msra.mxu0 0.0
  %448 = vmatpush.msra.mxu0 %v230
  %449 = vmatpush.msra.mxu0 %v229
  %450 = vmatmul.f32.gmra.mxu0 %v411
  %v451 = vpop.f32.mrf.mxu0
  %v452 = vadd.f32 0.0, %v451
  %453 = vmatmul.f32.gmra.mxu0 %v414
  %v454 = vpop.f32.mrf.mxu0
  %v455 = vadd.f32 0.0, %v454
  %456 = vmatmul.f32.gmra.mxu0 %v417
  %v457 = vpop.f32.mrf.mxu0
  %v458 = vadd.f32 0.0, %v457
  %459 = vmatmul.f32.gmra.mxu0 %v420
  %v460 = vpop.f32.mrf.mxu0
  %v461 = vadd.f32 0.0, %v460
  %462 = vmatmul.f32.gmra.mxu0 %v423
  %v463 = vpop.f32.mrf.mxu0
  %v464 = vadd.f32 0.0, %v463
  %465 = vmatmul.f32.gmra.mxu0 %v426
  %v466 = vpop.f32.mrf.mxu0
  %v467 = vadd.f32 0.0, %v466
  %468 = vmatmul.f32.gmra.mxu0 %v429
  %v469 = vpop.f32.mrf.mxu0
  %v470 = vadd.f32 0.0, %v469
  %471 = vmatmul.f32.gmra.mxu0 %v432
  %v472 = vpop.f32.mrf.mxu0
  %v473 = vadd.f32 0.0, %v472
  %474 = vdwg.mxu0
  %475 = vmatpush.msra.mxu0 0.0
  %476 = vmatpush.msra.mxu0 0.0
  %477 = vmatpush.msra.mxu0 0.0
  %478 = vmatpush.msra.mxu0 0.0
  %479 = vmatpush.msra.mxu0 0.0
  %480 = vmatpush.msra.mxu0 0.0
  %481 = vmatpush.msra.mxu0 0.0
  %482 = vmatpush.msra.mxu0 0.0
  %483 = vmatpush.msra.mxu0 0.0
  %484 = vmatpush.msra.mxu0 0.0
  %485 = vmatpush.msra.mxu0 0.0
  %486 = vmatpush.msra.mxu0 0.0
  %487 = vmatpush.msra.mxu0 0.0
  %488 = vmatpush.msra.mxu0 0.0
  %489 = vmatpush.msra.mxu0 %v228
  %490 = vmatpush.msra.mxu0 %v227
  %491 = vmatmul.f32.gmra.mxu0 %v237
  %v492 = vpop.f32.mrf.mxu0
  %v493 = vadd.f32 %v452, %v492
  %494 = vmatmul.f32.gmra.mxu0 %v240
  %v495 = vpop.f32.mrf.mxu0
  %v496 = vadd.f32 %v455, %v495
  %497 = vmatmul.f32.gmra.mxu0 %v243
  %v498 = vpop.f32.mrf.mxu0
  %v499 = vadd.f32 %v458, %v498
  %500 = vmatmul.f32.gmra.mxu0 %v246
  %v501 = vpop.f32.mrf.mxu0
  %v502 = vadd.f32 %v461, %v501
  %503 = vmatmul.f32.gmra.mxu0 %v249
  %v504 = vpop.f32.mrf.mxu0
  %v505 = vadd.f32 %v464, %v504
  %506 = vmatmul.f32.gmra.mxu0 %v252
  %v507 = vpop.f32.mrf.mxu0
  %v508 = vadd.f32 %v467, %v507
  %509 = vmatmul.f32.gmra.mxu0 %v255
  %v510 = vpop.f32.mrf.mxu0
  %v511 = vadd.f32 %v470, %v510
  %512 = vmatmul.f32.gmra.mxu0 %v258
  %v513 = vpop.f32.mrf.mxu0
  %v514 = vadd.f32 %v473, %v513
  %515 = vdwg.mxu0
  %s516 = scalar_lea.vmem %s2, 16
  %v517 = vld [vmem:[%s516] sm:$0xff]
  %v518 = vld [vmem:[%s516 + $0x8] sm:$0xff]
  %519 = vmatpush.msra.mxu0 0.0
  %520 = vmatpush.msra.mxu0 0.0
  %521 = vmatpush.msra.mxu0 0.0
  %522 = vmatpush.msra.mxu0 0.0
  %523 = vmatpush.msra.mxu0 0.0
  %524 = vmatpush.msra.mxu0 0.0
  %525 = vmatpush.msra.mxu0 0.0
  %526 = vmatpush.msra.mxu0 0.0
  %527 = vmatpush.msra.mxu0 0.0
  %528 = vmatpush.msra.mxu0 0.0
  %529 = vmatpush.msra.mxu0 0.0
  %530 = vmatpush.msra.mxu0 0.0
  %531 = vmatpush.msra.mxu0 0.0
  %532 = vmatpush.msra.mxu0 0.0
  %533 = vmatpush.msra.mxu0 %v518
  %534 = vmatpush.msra.mxu0 %v517
  %535 = vmatmul.f32.gmra.mxu0 %v411
  %v536 = vpop.f32.mrf.mxu0
  %v537 = vadd.f32 0.0, %v536
  %538 = vmatmul.f32.gmra.mxu0 %v414
  %v539 = vpop.f32.mrf.mxu0
  %v540 = vadd.f32 0.0, %v539
  %541 = vmatmul.f32.gmra.mxu0 %v417
  %v542 = vpop.f32.mrf.mxu0
  %v543 = vadd.f32 0.0, %v542
  %544 = vmatmul.f32.gmra.mxu0 %v420
  %v545 = vpop.f32.mrf.mxu0
  %v546 = vadd.f32 0.0, %v545
  %547 = vmatmul.f32.gmra.mxu0 %v423
  %v548 = vpop.f32.mrf.mxu0
  %v549 = vadd.f32 0.0, %v548
  %550 = vmatmul.f32.gmra.mxu0 %v426
  %v551 = vpop.f32.mrf.mxu0
  %v552 = vadd.f32 0.0, %v551
  %553 = vmatmul.f32.gmra.mxu0 %v429
  %v554 = vpop.f32.mrf.mxu0
  %v555 = vadd.f32 0.0, %v554
  %556 = vmatmul.f32.gmra.mxu0 %v432
  %v557 = vpop.f32.mrf.mxu0
  %v558 = vadd.f32 0.0, %v557
  %559 = vdwg.mxu0
  %v560 = vmul.f32 %v304, %v537
  %v561 = vmul.f32 %v309, %v540
  %v562 = vmul.f32 %v314, %v543
  %v563 = vmul.f32 %v319, %v546
  %v564 = vmul.f32 %v324, %v549
  %v565 = vmul.f32 %v329, %v552
  %v566 = vmul.f32 %v334, %v555
  %v567 = vmul.f32 %v339, %v558
  %568 = vmatpush.msra.mxu0 0.0
  %569 = vmatpush.msra.mxu0 0.0
  %570 = vmatpush.msra.mxu0 0.0
  %571 = vmatpush.msra.mxu0 0.0
  %572 = vmatpush.msra.mxu0 0.0
  %573 = vmatpush.msra.mxu0 0.0
  %574 = vmatpush.msra.mxu0 0.0
  %575 = vmatpush.msra.mxu0 0.0
  %576 = vmatpush.msra.mxu0 %v567
  %577 = vmatpush.msra.mxu0 %v566
  %578 = vmatpush.msra.mxu0 %v565
  %579 = vmatpush.msra.mxu0 %v564
  %580 = vmatpush.msra.mxu0 %v563
  %581 = vmatpush.msra.mxu0 %v562
  %582 = vmatpush.msra.mxu0 %v561
  %583 = vmatpush.msra.mxu0 %v560
  %584 = vmatmul.f32.gmra.mxu0 %v75
  %v585 = vpop.f32.mrf.mxu0
  %v586 = vadd.f32 %v560, %v585
  %587 = vmatmul.f32.gmra.mxu0 %v78
  %v588 = vpop.f32.mrf.mxu0
  %v589 = vadd.f32 %v561, %v588
  %590 = vmatmul.f32.gmra.mxu0 %v81
  %v591 = vpop.f32.mrf.mxu0
  %v592 = vadd.f32 %v562, %v591
  %593 = vmatmul.f32.gmra.mxu0 %v84
  %v594 = vpop.f32.mrf.mxu0
  %v595 = vadd.f32 %v563, %v594
  %596 = vmatmul.f32.gmra.mxu0 %v87
  %v597 = vpop.f32.mrf.mxu0
  %v598 = vadd.f32 %v564, %v597
  %599 = vmatmul.f32.gmra.mxu0 %v90
  %v600 = vpop.f32.mrf.mxu0
  %v601 = vadd.f32 %v565, %v600
  %602 = vmatmul.f32.gmra.mxu0 %v93
  %v603 = vpop.f32.mrf.mxu0
  %v604 = vadd.f32 %v566, %v603
  %605 = vmatmul.f32.gmra.mxu0 %v96
  %v606 = vpop.f32.mrf.mxu0
  %v607 = vadd.f32 %v567, %v606
  %608 = vdwg.mxu0
  %v609 = vmul.f32 %v304, %v586
  %v610 = vmul.f32 %v309, %v589
  %v611 = vmul.f32 %v314, %v592
  %v612 = vmul.f32 %v319, %v595
  %v613 = vmul.f32 %v324, %v598
  %v614 = vmul.f32 %v329, %v601
  %v615 = vmul.f32 %v334, %v604
  %v616 = vmul.f32 %v339, %v607
  %s617 = scalar_lea.vmem %s3, 1
  %v618 = vld [vmem:[%s617] sm:$0x1]
  %v620 = vperm.slane %v618, 0
  %v622 = vadd.f32 %v609, %v620
  %v623 = vadd.f32 %v610, %v620
  %v624 = vadd.f32 %v611, %v620
  %v625 = vadd.f32 %v612, %v620
  %v626 = vadd.f32 %v613, %v620
  %v627 = vadd.f32 %v614, %v620
  %v628 = vadd.f32 %v615, %v620
  %v629 = vadd.f32 %v616, %v620
  %v631 = vsel %vm235, %v622, 0
  %v634 = vsel %vm235, %v623, 0
  %v637 = vsel %vm235, %v624, 0
  %v640 = vsel %vm235, %v625, 0
  %v643 = vsel %vm235, %v626, 0
  %v646 = vsel %vm235, %v627, 0
  %v649 = vsel %vm235, %v628, 0
  %v652 = vsel %vm235, %v629, 0
  %654 = vmatpush.msra.mxu0 0.0
  %655 = vmatpush.msra.mxu0 0.0
  %656 = vmatpush.msra.mxu0 0.0
  %657 = vmatpush.msra.mxu0 0.0
  %658 = vmatpush.msra.mxu0 0.0
  %659 = vmatpush.msra.mxu0 0.0
  %660 = vmatpush.msra.mxu0 0.0
  %661 = vmatpush.msra.mxu0 0.0
  %662 = vmatpush.msra.mxu0 0.0
  %663 = vmatpush.msra.mxu0 0.0
  %664 = vmatpush.msra.mxu0 0.0
  %665 = vmatpush.msra.mxu0 0.0
  %666 = vmatpush.msra.mxu0 0.0
  %667 = vmatpush.msra.mxu0 0.0
  %668 = vmatpush.msra.mxu0 %v232
  %669 = vmatpush.msra.mxu0 %v231
  %670 = vmatmul.f32.gmra.mxu0 %v631
  %v671 = vpop.f32.mrf.mxu0
  %v672 = vadd.f32 0.0, %v671
  %673 = vmatmul.f32.gmra.mxu0 %v634
  %v674 = vpop.f32.mrf.mxu0
  %v675 = vadd.f32 0.0, %v674
  %676 = vmatmul.f32.gmra.mxu0 %v637
  %v677 = vpop.f32.mrf.mxu0
  %v678 = vadd.f32 0.0, %v677
  %679 = vmatmul.f32.gmra.mxu0 %v640
  %v680 = vpop.f32.mrf.mxu0
  %v681 = vadd.f32 0.0, %v680
  %682 = vmatmul.f32.gmra.mxu0 %v643
  %v683 = vpop.f32.mrf.mxu0
  %v684 = vadd.f32 0.0, %v683
  %685 = vmatmul.f32.gmra.mxu0 %v646
  %v686 = vpop.f32.mrf.mxu0
  %v687 = vadd.f32 0.0, %v686
  %688 = vmatmul.f32.gmra.mxu0 %v649
  %v689 = vpop.f32.mrf.mxu0
  %v690 = vadd.f32 0.0, %v689
  %691 = vmatmul.f32.gmra.mxu0 %v652
  %v692 = vpop.f32.mrf.mxu0
  %v693 = vadd.f32 0.0, %v692
  %694 = vdwg.mxu0
  %v695 = vadd.f32 %v493, %v672
  %v696 = vadd.f32 %v496, %v675
  %v697 = vadd.f32 %v499, %v678
  %v698 = vadd.f32 %v502, %v681
  %v699 = vadd.f32 %v505, %v684
  %v700 = vadd.f32 %v508, %v687
  %v701 = vadd.f32 %v511, %v690
  %v702 = vadd.f32 %v514, %v693
  %v703 = vld [vmem:[%s5] sm:$0x1]
  %v705 = vperm.slane %v703, 0
  %v707 = vadd.f32 %v695, %v705
  %v708 = vadd.f32 %v696, %v705
  %v709 = vadd.f32 %v697, %v705
  %v710 = vadd.f32 %v698, %v705
  %v711 = vadd.f32 %v699, %v705
  %v712 = vadd.f32 %v700, %v705
  %v713 = vadd.f32 %v701, %v705
  %v714 = vadd.f32 %v702, %v705
  %s715 = sld [smem:[#allocation2]]
  %vm716 = vcmp.gt.f32.partialorder %v707, 0.0
  %vm717 = vcmp.gt.f32.partialorder %v708, 0.0
  %vm718 = vcmp.gt.f32.partialorder %v709, 0.0
  %vm719 = vcmp.gt.f32.partialorder %v710, 0.0
  %vm720 = vcmp.gt.f32.partialorder %v711, 0.0
  %vm721 = vcmp.gt.f32.partialorder %v712, 0.0
  %vm722 = vcmp.gt.f32.partialorder %v713, 0.0
  %vm723 = vcmp.gt.f32.partialorder %v714, 0.0
  %v724 = vstv %s715
  %v725 = vmul.f32 %v724, %v707
  %v726 = vmul.f32 %v724, %v708
  %v727 = vmul.f32 %v724, %v709
  %v728 = vmul.f32 %v724, %v710
  %v729 = vmul.f32 %v724, %v711
  %v730 = vmul.f32 %v724, %v712
  %v731 = vmul.f32 %v724, %v713
  %v732 = vmul.f32 %v724, %v714
  %v733 = vsel %vm716, %v707, %v725
  %v734 = vsel %vm717, %v708, %v726
  %v735 = vsel %vm718, %v709, %v727
  %v736 = vsel %vm719, %v710, %v728
  %v737 = vsel %vm720, %v711, %v729
  %v738 = vsel %vm721, %v712, %v730
  %v739 = vsel %vm722, %v713, %v731
  %v740 = vsel %vm723, %v714, %v732
  %v741 = vld [vmem:[%s6] sm:$0xff]
  %v742 = vld [vmem:[%s6 + $0x8] sm:$0xff]
  %v743 = vld [vmem:[%s6 + $0x10] sm:$0xff]
  %v744 = vld [vmem:[%s6 + $0x18] sm:$0xff]
  %v745 = vld [vmem:[%s6 + $0x20] sm:$0xff]
  %v746 = vld [vmem:[%s6 + $0x28] sm:$0xff]
  %v747 = vld [vmem:[%s6 + $0x30] sm:$0xff]
  %v748 = vld [vmem:[%s6 + $0x38] sm:$0xff]
  %v749 = vld [vmem:[%s6 + $0x40] sm:$0xff]
  %v750 = vld [vmem:[%s6 + $0x48] sm:$0xff]
  %v751 = vld [vmem:[%s6 + $0x50] sm:$0xff]
  %v752 = vld [vmem:[%s6 + $0x58] sm:$0xff]
  %v753 = vld [vmem:[%s7] sm:$0x1]
  %v755 = vperm.slane %v753, 0
  %vm757 = vcmask 785408
  %v759 = vsel %vm757, %v733, 0
  %v762 = vsel %vm757, %v734, 0
  %v765 = vsel %vm757, %v735, 0
  %v768 = vsel %vm757, %v736, 0
  %v771 = vsel %vm757, %v737, 0
  %v774 = vsel %vm757, %v738, 0
  %v777 = vsel %vm757, %v739, 0
  %v780 = vsel %vm757, %v740, 0
  %782 = vmatpush.msra.mxu0 0.0
  %783 = vmatpush.msra.mxu0 0.0
  %784 = vmatpush.msra.mxu0 0.0
  %785 = vmatpush.msra.mxu0 0.0
  %786 = vmatpush.msra.mxu0 %v752
  %787 = vmatpush.msra.mxu0 %v751
  %788 = vmatpush.msra.mxu0 %v750
  %789 = vmatpush.msra.mxu0 %v749
  %790 = vmatpush.msra.mxu0 %v748
  %791 = vmatpush.msra.mxu0 %v747
  %792 = vmatpush.msra.mxu0 %v746
  %793 = vmatpush.msra.mxu0 %v745
  %794 = vmatpush.msra.mxu0 %v744
  %795 = vmatpush.msra.mxu0 %v743
  %796 = vmatpush.msra.mxu0 %v742
  %797 = vmatpush.msra.mxu0 %v741
  %798 = vmatmul.f32.gmra.mxu0 %v759
  %v799 = vpop.f32.mrf.mxu0
  %v800 = vadd.f32 %v755, %v799
  %801 = vmatmul.f32.gmra.mxu0 %v762
  %v802 = vpop.f32.mrf.mxu0
  %v803 = vadd.f32 %v755, %v802
  %804 = vmatmul.f32.gmra.mxu0 %v765
  %v805 = vpop.f32.mrf.mxu0
  %v806 = vadd.f32 %v755, %v805
  %807 = vmatmul.f32.gmra.mxu0 %v768
  %v808 = vpop.f32.mrf.mxu0
  %v809 = vadd.f32 %v755, %v808
  %810 = vmatmul.f32.gmra.mxu0 %v771
  %v811 = vpop.f32.mrf.mxu0
  %v812 = vadd.f32 %v755, %v811
  %813 = vmatmul.f32.gmra.mxu0 %v774
  %v814 = vpop.f32.mrf.mxu0
  %v815 = vadd.f32 %v755, %v814
  %816 = vmatmul.f32.gmra.mxu0 %v777
  %v817 = vpop.f32.mrf.mxu0
  %v818 = vadd.f32 %v755, %v817
  %819 = vmatmul.f32.gmra.mxu0 %v780
  %v820 = vpop.f32.mrf.mxu0
  %v821 = vadd.f32 %v755, %v820
  %822 = vdwg.mxu0
  %823 = vst [vmem:[%s9] sm:$0xff] %v800
  %824 = vst [vmem:[%s9 + $0x8] sm:$0xff] %v803
  %825 = vst [vmem:[%s9 + $0x10] sm:$0xff] %v806
  %826 = vst [vmem:[%s9 + $0x18] sm:$0xff] %v809
  %827 = vst [vmem:[%s9 + $0x20] sm:$0xff] %v812
  %828 = vst [vmem:[%s9 + $0x28] sm:$0xff] %v815
  %829 = vst [vmem:[%s9 + $0x30] sm:$0xff] %v818
  %830 = vst [vmem:[%s9 + $0x38] sm:$0xff] %v821
  // Predicated region
  $region38: #{jknet_forward.1} parent=0 // pred_check
    _
  $region39: #{jknet_forward.1} parent=0 // pred_check_branch
    %832 = sbr.rel (0) target = $region41
  $region40: #{jknet_forward.1} parent=0 // pred_region
    _
  $region41: #{jknet_forward.1} parent=0 // pred_fallthru
    _
  // Predicated region
  $region42: #{jknet_forward.1} parent=0 // pred_check
    _
  $region43: #{jknet_forward.1} parent=0 // pred_check_branch
    %834 = sbr.rel (0) target = $region45
  $region44: #{jknet_forward.1} parent=0 // pred_region
    _
  $region45: #{jknet_forward.1} parent=0 // pred_fallthru
    _

</llo_original>
